<compile_context>
chip_gen: v6e
topology: v6e:2x2x1
jax: 0.10.0
libtpu: 0.0.40
codegen_flags: <defaults>
</compile_context>

<pallas_src>
import functools

import jax
import jax.numpy as jnp
from jax.experimental import pallas as pl
from jax.experimental.pallas import tpu as pltpu


def _round_up(x, m):
    return ((x + m - 1) // m) * m


def _decoder_kernel(tok_ref,      # SMEM (T,) int32 (scalar prefetch): token ids
                    emb_ref,      # VMEM (V, 1, Ep) bf16 : embedding table (resident)
                    wcat_ref,     # VMEM (Ep+Hp, 4Hp) bf16 : fused [W_ih; W_hh] (resident)
                    b_ref,        # VMEM (1, 4Hp) f32 : b_ih + b_hh, gate-padded (resident)
                    h0_ref,       # VMEM (1, Hp) f32 : initial hidden state (padded)
                    c0_ref,       # VMEM (1, Hp) f32 : initial cell state (padded)
                    wout_ref,     # VMEM (Hp, Vp) bf16 : output Linear weight (resident)
                    bout_ref,     # VMEM (1, Vp) f32 : output bias (-1e30 on padded vocab)
                    logp_ref,     # VMEM (1, 1, Vp) f32 out : this step's log-softmax
                    hout_ref,     # VMEM (1, Hp) f32 out : final hidden state
                    cout_ref,     # VMEM (1, Hp) f32 out : final cell state
                    h_sc,         # VMEM (1, Hp) f32 scratch : carried hidden state
                    c_sc,         # VMEM (1, Hp) f32 scratch : carried cell state
                    xh_sc,        # VMEM (1, Ep+Hp) bf16 scratch : [x, h] MXU operand
                    *, ep, hp):
    t = pl.program_id(0)

    # Seed the carried state from the initial hidden/cell on the first step only.
    @pl.when(t == 0)
    def _():
        h_sc[...] = h0_ref[...]
        c_sc[...] = c0_ref[...]

    # --- embedding lookup + ReLU: dynamic index on the leading (untiled) axis of the
    #     VMEM-resident table; padded lanes are zero and stay zero through ReLU. ---
    tok = tok_ref[t]
    x = jnp.maximum(emb_ref[tok], 0)              # (1, Ep) bf16

    h_prev = h_sc[...]                            # (1, Hp) f32
    c_prev = c_sc[...]

    # Build [x, h] in a persistent lane-aligned scratch (no jnp.concatenate copies);
    # Ep and Hp are 128-multiples so both writes are full-lane stores.
    xh_sc[:, :ep] = x
    xh_sc[:, ep:] = h_prev.astype(jnp.bfloat16)

    # --- fused single-step LSTM cell: one MXU matvec for all four gates, f32 accumulate.
    gates = jnp.dot(xh_sc[...], wcat_ref[...],
                    preferred_element_type=jnp.float32) + b_ref[...]      # (1, 4Hp)

    # Gate segments are padded to hp (multiple of 128) -> lane-aligned static slices.
    # Elementwise gate math stays in f32 (v5e VPU/EUP have no bf16 datapath).
    i_g = jax.nn.sigmoid(gates[:, 0 * hp:1 * hp])
    f_g = jax.nn.sigmoid(gates[:, 1 * hp:2 * hp])
    g_g = jnp.tanh(gates[:, 2 * hp:3 * hp])
    o_g = jax.nn.sigmoid(gates[:, 3 * hp:4 * hp])

    c_new = f_g * c_prev + i_g * g_g
    h_new = o_g * jnp.tanh(c_new)

    # Carry state across grid steps; the final-state output blocks have a constant
    # index_map, so they are written back to HBM only once at the end of the grid.
    h_sc[...] = h_new
    c_sc[...] = c_new
    hout_ref[...] = h_new
    cout_ref[...] = c_new

    # --- output projection + numerically-stable LogSoftmax(dim=1) ---
    logits = (jnp.dot(h_new.astype(jnp.bfloat16), wout_ref[...],
                      preferred_element_type=jnp.float32) + bout_ref[...])  # (1, Vp)
    m = jnp.max(logits, axis=1, keepdims=True)
    lse = jnp.log(jnp.sum(jnp.exp(logits - m), axis=1, keepdims=True)) + m
    logp_ref[0] = logits - lse


def decoder_rnn_decode(tokens, packed, hidden=None):
    """Run T decode steps in ONE pallas_call (weights resident, state in VMEM scratch).

    tokens: int array of shape (T,)
    packed: dict from pack_params()
    hidden: optional (h, c), each (1, H). Defaults to zeros (PyTorch LSTM default).
    Returns (log_probs (T, V), (h_T (1, H), c_T (1, H))).
    """
    H, V = packed["H"], packed["V"]
    Ep, Hp, Vp = packed["Ep"], packed["Hp"], packed["Vp"]
    T = int(tokens.shape[0])

    if hidden is None:
        h0 = jnp.zeros((1, H), jnp.float32)
        c0 = jnp.zeros((1, H), jnp.float32)
    else:
        h0, c0 = hidden
    # Pad state to the lane-aligned width; padded lanes provably stay zero across steps.
    h0p = jnp.zeros((1, Hp), jnp.float32).at[:, :H].set(h0)
    c0p = jnp.zeros((1, Hp), jnp.float32).at[:, :H].set(c0)

    # Clamp token ids so the dynamic VMEM gather can never read out of bounds
    # (there is no runtime bounds check on VMEM refs).
    tok = jnp.clip(tokens.reshape((T,)).astype(jnp.int32), 0, V - 1)

    kernel = functools.partial(_decoder_kernel, ep=Ep, hp=Hp)

    # --- VMEM budget: weights are resident (constant index_map -> single-buffered),
    #     only the per-step log-prob output block is pipelined/double-buffered. ---
    def _nbytes(a):
        return int(a.size) * a.dtype.itemsize

    resident = (_nbytes(packed["emb"]) + _nbytes(packed["w_cat"]) +
                _nbytes(packed["w_out"]) + _nbytes(packed["b_cat"]) +
                _nbytes(packed["b_out"]) + 2 * Hp * 4 + 2 * Hp * 4)
    per_step = 2 * Vp * 4                                   # double-buffered logp block
    scratch = 2 * Hp * 4 + (Ep + Hp) * 2                    # h/c carry + xh buffer
    vmem_need = resident + per_step + scratch

    cp_kwargs = {}
    if vmem_need > 16 * 2 ** 20:                            # smallest scoped default (v5e)
        try:
            vmem_cap = pltpu.get_tpu_info().vmem_capacity_bytes
        except Exception:
            vmem_cap = 64 * 2 ** 20                         # v7x physical (most restrictive)
        # TODO(synk): when the vocab head itself exceeds VMEM, tile w_out over Vp with a
        #             grid axis instead of only raising the limit.
        cp_kwargs["vmem_limit_bytes"] = int(min(vmem_need + (4 << 20), vmem_cap))

    cost = pl.CostEstimate(
        flops=T * (2 * (Ep + Hp) * 4 * Hp + 2 * Hp * Vp),
        transcendentals=T * (4 * Hp + Vp),
        bytes_accessed=int(resident + T * (Vp * 4 + 8) + 2 * Hp * 4),
    )

    cmap2 = lambda t, ids: (0, 0)                            # resident 2-D blocks

    logp, h_new, c_new = pl.pallas_call(
        kernel,
        out_shape=(
            jax.ShapeDtypeStruct((T, 1, Vp), jnp.float32),   # per-step log probs
            jax.ShapeDtypeStruct((1, Hp), jnp.float32),      # final h
            jax.ShapeDtypeStruct((1, Hp), jnp.float32),      # final c
        ),
        grid_spec=pltpu.PrefetchScalarGridSpec(
            num_scalar_prefetch=1,                           # token ids -> SMEM
            grid=(T,),
            in_specs=[
                pl.BlockSpec((packed["emb"].shape[0], 1, Ep), lambda t, ids: (0, 0, 0)),
                pl.BlockSpec((Ep + Hp, 4 * Hp), cmap2),      # w_cat (resident)
                pl.BlockSpec((1, 4 * Hp), cmap2),            # b_cat
                pl.BlockSpec((1, Hp), cmap2),                # h0
                pl.BlockSpec((1, Hp), cmap2),                # c0
                pl.BlockSpec((Hp, Vp), cmap2),               # w_out (resident)
                pl.BlockSpec((1, Vp), cmap2),                # b_out
            ],
            out_specs=(
                pl.BlockSpec((1, 1, Vp), lambda t, ids: (t, 0, 0)),
                pl.BlockSpec((1, Hp), cmap2),
                pl.BlockSpec((1, Hp), cmap2),
            ),
            scratch_shapes=[
                pltpu.VMEM((1, Hp), jnp.float32),            # carried hidden state
                pltpu.VMEM((1, Hp), jnp.float32),            # carried cell state
                pltpu.VMEM((1, Ep + Hp), jnp.bfloat16),      # [x, h] MXU operand
            ],
        ),
        compiler_params=pltpu.CompilerParams(
            dimension_semantics=("arbitrary",), **cp_kwargs),
        cost_estimate=cost,
    )(tok, packed["emb"], packed["w_cat"], packed["b_cat"], h0p, c0p,
      packed["w_out"], packed["b_out"])

    log_probs = logp.reshape(T, Vp)[:, :V]
    return log_probs, (h_new[:, :H], c_new[:, :H])


def decoder_rnn_forward(token_id, packed, hidden=None):
    """One DecoderRNN forward step (== the PyTorch module's forward())."""
    log_probs, hidden = decoder_rnn_decode(token_id.reshape((1,)), packed, hidden)
    return log_probs, hidden


def init_torch_params(key, vocab_size, embedding_dim, hidden_size):
    """f32 parameters with PyTorch layouts: w_ih (4H,E), w_hh (4H,H), w_out (V,H)."""
    ks = jax.random.split(key, 7)
    s = 0.1
    return {
        "emb": jax.random.normal(ks[0], (vocab_size, embedding_dim), jnp.float32) * s,
        "w_ih": jax.random.normal(ks[1], (4 * hidden_size, embedding_dim), jnp.float32) * s,
        "w_hh": jax.random.normal(ks[2], (4 * hidden_size, hidden_size), jnp.float32) * s,
        "b_ih": jax.random.normal(ks[3], (4 * hidden_size,), jnp.float32) * s,
        "b_hh": jax.random.normal(ks[4], (4 * hidden_size,), jnp.float32) * s,
        "w_out": jax.random.normal(ks[5], (vocab_size, hidden_size), jnp.float32) * s,
        "b_out": jax.random.normal(ks[6], (vocab_size,), jnp.float32) * s,
    }


def pack_params(raw, vocab_size, embedding_dim, hidden_size):
    """Build padded, pre-transposed, bf16 kernel parameters (gate order i,f,g,o)."""
    E, H, V = embedding_dim, hidden_size, vocab_size
    Ep, Hp, Vp = _round_up(E, 128), _round_up(H, 128), _round_up(V, 128)

    # Embedding as (V, 1, Ep) so the in-kernel gather is a dynamic index on the leading
    # (untiled) axis of a VMEM-resident table.
    emb_p = jnp.zeros((V, 1, Ep), jnp.float32).at[:, 0, :E].set(raw["emb"])

    w_cat = jnp.zeros((Ep + Hp, 4 * Hp), jnp.float32)   # [W_ih; W_hh], gate-segment padded
    b_cat = jnp.zeros((1, 4 * Hp), jnp.float32)
    for k in range(4):                                   # PyTorch gate order: i, f, g, o
        w_ih_k = raw["w_ih"][k * H:(k + 1) * H, :]       # (H, E)
        w_hh_k = raw["w_hh"][k * H:(k + 1) * H, :]       # (H, H)
        w_cat = w_cat.at[:E, k * Hp:k * Hp + H].set(w_ih_k.T)
        w_cat = w_cat.at[Ep:Ep + H, k * Hp:k * Hp + H].set(w_hh_k.T)
        b_cat = b_cat.at[0, k * Hp:k * Hp + H].set(
            raw["b_ih"][k * H:(k + 1) * H] + raw["b_hh"][k * H:(k + 1) * H])

    w_out = jnp.zeros((Hp, Vp), jnp.float32).at[:H, :V].set(raw["w_out"].T)
    # Padded vocab lanes get a huge negative bias so LogSoftmax ignores them (logits f32).
    b_out = jnp.full((1, Vp), -1e30, jnp.float32).at[0, :V].set(raw["b_out"])

    return {
        "emb": emb_p.astype(jnp.bfloat16),
        "w_cat": w_cat.astype(jnp.bfloat16),
        "b_cat": b_cat,
        "w_out": w_out.astype(jnp.bfloat16),
        "b_out": b_out,
        "E": E, "H": H, "V": V, "Ep": Ep, "Hp": Hp, "Vp": Vp,
    }


def _reference_forward(token_id, raw, hidden_size, hidden=None):
    """Pure-JAX f32 reference matching the PyTorch module semantics."""
    H = hidden_size
    if hidden is None:
        h0 = jnp.zeros((1, H), jnp.float32)
        c0 = jnp.zeros((1, H), jnp.float32)
    else:
        h0, c0 = hidden
    x = jnp.maximum(raw["emb"][token_id[0]][None, :], 0.0)
    gates = x @ raw["w_ih"].T + h0 @ raw["w_hh"].T + raw["b_ih"] + raw["b_hh"]
    i_g = jax.nn.sigmoid(gates[:, 0 * H:1 * H])
    f_g = jax.nn.sigmoid(gates[:, 1 * H:2 * H])
    g_g = jnp.tanh(gates[:, 2 * H:3 * H])
    o_g = jax.nn.sigmoid(gates[:, 3 * H:4 * H])
    c_new = f_g * c0 + i_g * g_g
    h_new = o_g * jnp.tanh(c_new)
    logits = h_new @ raw["w_out"].T + raw["b_out"]
    return jax.nn.log_softmax(logits, axis=1), (h_new, c_new)


def _reference_decode(tokens, raw, hidden_size, hidden=None):
    lps = []
    for i in range(tokens.shape[0]):
        lp, hidden = _reference_forward(tokens[i:i + 1], raw, hidden_size, hidden)
        lps.append(lp)
    return jnp.concatenate(lps, axis=0), hidden


if __name__ == "__main__":
    hidden_size = 32
    embedding_dim = 32
    output_size = 64   # vocab size

    key = jax.random.PRNGKey(0)
    pkey, tkey, hkey = jax.random.split(key, 3)
    raw = init_torch_params(pkey, output_size, embedding_dim, hidden_size)
    packed = pack_params(raw, output_size, embedding_dim, hidden_size)

    # init_hidden(): h_0 ~ randn, c_0 = zeros
    h0 = jax.random.normal(hkey, (1, hidden_size), jnp.float32)
    c0 = jnp.zeros((1, hidden_size), jnp.float32)

    # ---- single-step forward (exactly the PyTorch module's forward()) ----
    token = jax.random.randint(tkey, (1,), 0, output_size, dtype=jnp.int32)
    ref_lp, (ref_h, ref_c) = _reference_forward(token, raw, hidden_size, hidden=(h0, c0))
    log_probs, (h_new, c_new) = decoder_rnn_forward(token, packed, hidden=(h0, c0))
    jax.block_until_ready((log_probs, h_new, c_new))

    assert log_probs.shape == (1, output_size)
    assert h_new.shape == (1, hidden_size) and c_new.shape == (1, hidden_size)
    # bf16 weights -> slightly looser tolerance vs. the pure-f32 reference.
    assert jnp.allclose(log_probs, ref_lp, atol=2e-2), "log_probs mismatch"
    assert jnp.allclose(h_new, ref_h, atol=2e-2), "h mismatch"
    assert jnp.allclose(c_new, ref_c, atol=2e-2), "c mismatch"

    # ---- multi-step decode: whole loop inside ONE pallas_call ----
    T = 8
    tokens = jax.random.randint(jax.random.PRNGKey(1), (T,), 0, output_size,
                                dtype=jnp.int32)
    ref_lps, (ref_hT, ref_cT) = _reference_decode(tokens, raw, hidden_size, hidden=(h0, c0))
    lps, (hT, cT) = decoder_rnn_decode(tokens, packed, hidden=(h0, c0))
    jax.block_until_ready((lps, hT, cT))

    assert lps.shape == (T, output_size)
    assert jnp.allclose(lps, ref_lps, atol=3e-2), "multi-step log_probs mismatch"
    assert jnp.allclose(hT, ref_hT, atol=3e-2), "multi-step h mismatch"
    assert jnp.allclose(cT, ref_cT, atol=3e-2), "multi-step c mismatch"

    print("KERNEL_OK")
</pallas_src>

<mosaic_0001>
module attributes {stable_mosaic.version = 11 : i64} {
  func.func @_decoder_kernel(%arg0: i32, %arg1: memref<1xi32, #tpu.memory_space<smem>>, %arg2: memref<64x1x128xbf16, #tpu.memory_space<vmem>>, %arg3: memref<256x512xbf16, #tpu.memory_space<vmem>>, %arg4: memref<1x512xf32, #tpu.memory_space<vmem>>, %arg5: memref<1x128xf32, #tpu.memory_space<vmem>>, %arg6: memref<1x128xf32, #tpu.memory_space<vmem>>, %arg7: memref<128x128xbf16, #tpu.memory_space<vmem>>, %arg8: memref<1x128xf32, #tpu.memory_space<vmem>>, %arg9: memref<1x1x128xf32, #tpu.memory_space<vmem>>, %arg10: memref<1x128xf32, #tpu.memory_space<vmem>>, %arg11: memref<1x128xf32, #tpu.memory_space<vmem>>, %arg12: memref<1x128xf32, #tpu.memory_space<vmem>>, %arg13: memref<1x128xf32, #tpu.memory_space<vmem>>, %arg14: memref<1x256xbf16, #tpu.memory_space<vmem>>) attributes {dimension_semantics = [#tpu.dimension_semantics<arbitrary>], iteration_bounds = array<i64: 1>, scalar_prefetch = 1 : i64, scratch_operands = 3 : i64, tpu.core_type = #tpu.core_type<tc>, window_params = [{pipeline_mode = #tpu.pipeline_mode<synchronous>, transform_indices = @transform_0, window_bounds = array<i64: 64, 1, 128>}, {pipeline_mode = #tpu.pipeline_mode<synchronous>, transform_indices = @transform_1, window_bounds = array<i64: 256, 512>}, {pipeline_mode = #tpu.pipeline_mode<synchronous>, transform_indices = @transform_2, window_bounds = array<i64: 1, 512>}, {pipeline_mode = #tpu.pipeline_mode<synchronous>, transform_indices = @transform_3, window_bounds = array<i64: 1, 128>}, {pipeline_mode = #tpu.pipeline_mode<synchronous>, transform_indices = @transform_4, window_bounds = array<i64: 1, 128>}, {pipeline_mode = #tpu.pipeline_mode<synchronous>, transform_indices = @transform_5, window_bounds = array<i64: 128, 128>}, {pipeline_mode = #tpu.pipeline_mode<synchronous>, transform_indices = @transform_6, window_bounds = array<i64: 1, 128>}, {transform_indices = @transform_7, window_bounds = array<i64: 1, 1, 128>}, {pipeline_mode = #tpu.pipeline_mode<synchronous>, transform_indices = @transform_8, window_bounds = array<i64: 1, 128>}, {pipeline_mode = #tpu.pipeline_mode<synchronous>, transform_indices = @transform_9, window_bounds = array<i64: 1, 128>}]} {
    %c0_i32 = arith.constant 0 : i32
    %0 = arith.cmpi eq, %arg0, %c0_i32 : i32
    %1 = arith.extui %0 : i1 to i32
    %c0_i32_0 = arith.constant 0 : i32
    %2 = arith.cmpi ne, %1, %c0_i32_0 : i32
    scf.if %2 {
      %c0_37 = arith.constant 0 : index
      %c0_38 = arith.constant 0 : index
      %68 = vector.load %arg5[%c0_37, %c0_38] : memref<1x128xf32, #tpu.memory_space<vmem>>, vector<1x128xf32>
      %c0_39 = arith.constant 0 : index
      %c0_40 = arith.constant 0 : index
      %69 = vector.load %arg12[%c0_39, %c0_40] : memref<1x128xf32, #tpu.memory_space<vmem>>, vector<1x128xf32>
      tpu.vector_store %arg12[%c0_39, %c0_40], %68 {strides = array<i32>} : memref<1x128xf32, #tpu.memory_space<vmem>>, vector<1x128xf32>,
      %c0_41 = arith.constant 0 : index
      %c0_42 = arith.constant 0 : index
      %70 = vector.load %arg6[%c0_41, %c0_42] : memref<1x128xf32, #tpu.memory_space<vmem>>, vector<1x128xf32>
      %c0_43 = arith.constant 0 : index
      %c0_44 = arith.constant 0 : index
      %71 = vector.load %arg13[%c0_43, %c0_44] : memref<1x128xf32, #tpu.memory_space<vmem>>, vector<1x128xf32>
      tpu.vector_store %arg13[%c0_43, %c0_44], %70 {strides = array<i32>} : memref<1x128xf32, #tpu.memory_space<vmem>>, vector<1x128xf32>,
    } else {
    }
    %3 = arith.index_cast %arg0 : i32 to index
    %4 = memref.load %arg1[%3] : memref<1xi32, #tpu.memory_space<smem>>
    %5 = arith.index_cast %4 : i32 to index
    %c0 = arith.constant 0 : index
    %c0_1 = arith.constant 0 : index
    %6 = vector.load %arg2[%5, %c0, %c0_1] : memref<64x1x128xbf16, #tpu.memory_space<vmem>>, vector<1x1x128xbf16>
    %7 = vector.shape_cast %6 : vector<1x1x128xbf16> to vector<1x128xbf16>
    %cst = arith.constant 0.000000e+00 : bf16
    %8 = vector.broadcast %cst : bf16 to vector<1x128xbf16>
    %9 = arith.maximumf %7, %8 : vector<1x128xbf16>
    %c0_2 = arith.constant 0 : index
    %c0_3 = arith.constant 0 : index
    %10 = vector.load %arg12[%c0_2, %c0_3] : memref<1x128xf32, #tpu.memory_space<vmem>>, vector<1x128xf32>
    %c0_4 = arith.constant 0 : index
    %c0_5 = arith.constant 0 : index
    %11 = vector.load %arg13[%c0_4, %c0_5] : memref<1x128xf32, #tpu.memory_space<vmem>>, vector<1x128xf32>
    %c0_6 = arith.constant 0 : index
    %c0_7 = arith.constant 0 : index
    %12 = vector.load %arg14[%c0_6, %c0_7] : memref<1x256xbf16, #tpu.memory_space<vmem>>, vector<1x128xbf16>
    tpu.vector_store %arg14[%c0_6, %c0_7], %9 {strides = array<i32>} : memref<1x256xbf16, #tpu.memory_space<vmem>>, vector<1x128xbf16>,
    %13 = arith.truncf %10 : vector<1x128xf32> to vector<1x128xbf16>
    %c0_8 = arith.constant 0 : index
    %c128 = arith.constant 128 : index
    %14 = vector.load %arg14[%c0_8, %c128] : memref<1x256xbf16, #tpu.memory_space<vmem>>, vector<1x128xbf16>
    tpu.vector_store %arg14[%c0_8, %c128], %13 {strides = array<i32>} : memref<1x256xbf16, #tpu.memory_space<vmem>>, vector<1x128xbf16>,
    %c0_9 = arith.constant 0 : index
    %c0_10 = arith.constant 0 : index
    %15 = vector.load %arg14[%c0_9, %c0_10] : memref<1x256xbf16, #tpu.memory_space<vmem>>, vector<1x256xbf16>
    %c0_11 = arith.constant 0 : index
    %c0_12 = arith.constant 0 : index
    %16 = vector.load %arg3[%c0_11, %c0_12] : memref<256x512xbf16, #tpu.memory_space<vmem>>, vector<256x512xbf16>
    %cst_13 = arith.constant dense<0.000000e+00> : vector<1x512xf32>
    %17 = tpu.matmul %15, %16, %cst_13 {dimension_numbers = #tpu.dot_dimension_numbers<[1], [0], [0], [1], [0, 0, 1, 1], [], []>} : vector<1x256xbf16>, vector<256x512xbf16>, vector<1x512xf32> -> vector<1x512xf32>
    %c0_14 = arith.constant 0 : index
    %c0_15 = arith.constant 0 : index
    %18 = vector.load %arg4[%c0_14, %c0_15] : memref<1x512xf32, #tpu.memory_space<vmem>>, vector<1x512xf32>
    %19 = arith.addf %17, %18 : vector<1x512xf32>
    %20 = vector.extract_strided_slice %19 {offsets = [0, 0], sizes = [1, 128], strides = [1, 1]} : vector<1x512xf32> to vector<1x128xf32>
    %21 = arith.negf %20 : vector<1x128xf32>
    %22 = math.exp %21 : vector<1x128xf32>
    %cst_16 = arith.constant 1.000000e+00 : f32
    %23 = vector.broadcast %cst_16 : f32 to vector<1x128xf32>
    %24 = arith.addf %23, %22 : vector<1x128xf32>
    %25 = arith.divf %23, %24 : vector<1x128xf32>
    %26 = vector.extract_strided_slice %19 {offsets = [0, 128], sizes = [1, 128], strides = [1, 1]} : vector<1x512xf32> to vector<1x128xf32>
    %27 = arith.negf %26 : vector<1x128xf32>
    %28 = math.exp %27 : vector<1x128xf32>
    %cst_17 = arith.constant 1.000000e+00 : f32
    %29 = vector.broadcast %cst_17 : f32 to vector<1x128xf32>
    %30 = arith.addf %29, %28 : vector<1x128xf32>
    %31 = arith.divf %29, %30 : vector<1x128xf32>
    %32 = vector.extract_strided_slice %19 {offsets = [0, 256], sizes = [1, 128], strides = [1, 1]} : vector<1x512xf32> to vector<1x128xf32>
    %33 = math.tanh %32 : vector<1x128xf32>
    %34 = vector.extract_strided_slice %19 {offsets = [0, 384], sizes = [1, 128], strides = [1, 1]} : vector<1x512xf32> to vector<1x128xf32>
    %35 = arith.negf %34 : vector<1x128xf32>
    %36 = math.exp %35 : vector<1x128xf32>
    %cst_18 = arith.constant 1.000000e+00 : f32
    %37 = vector.broadcast %cst_18 : f32 to vector<1x128xf32>
    %38 = arith.addf %37, %36 : vector<1x128xf32>
    %39 = arith.divf %37, %38 : vector<1x128xf32>
    %40 = arith.mulf %31, %11 : vector<1x128xf32>
    %41 = arith.mulf %25, %33 : vector<1x128xf32>
    %42 = arith.addf %40, %41 : vector<1x128xf32>
    %43 = math.tanh %42 : vector<1x128xf32>
    %44 = arith.mulf %39, %43 : vector<1x128xf32>
    %c0_19 = arith.constant 0 : index
    %c0_20 = arith.constant 0 : index
    %45 = vector.load %arg12[%c0_19, %c0_20] : memref<1x128xf32, #tpu.memory_space<vmem>>, vector<1x128xf32>
    tpu.vector_store %arg12[%c0_19, %c0_20], %44 {strides = array<i32>} : memref<1x128xf32, #tpu.memory_space<vmem>>, vector<1x128xf32>,
    %c0_21 = arith.constant 0 : index
    %c0_22 = arith.constant 0 : index
    %46 = vector.load %arg13[%c0_21, %c0_22] : memref<1x128xf32, #tpu.memory_space<vmem>>, vector<1x128xf32>
    tpu.vector_store %arg13[%c0_21, %c0_22], %42 {strides = array<i32>} : memref<1x128xf32, #tpu.memory_space<vmem>>, vector<1x128xf32>,
    %c0_23 = arith.constant 0 : index
    %c0_24 = arith.constant 0 : index
    %47 = vector.load %arg10[%c0_23, %c0_24] : memref<1x128xf32, #tpu.memory_space<vmem>>, vector<1x128xf32>
    tpu.vector_store %arg10[%c0_23, %c0_24], %44 {strides = array<i32>} : memref<1x128xf32, #tpu.memory_space<vmem>>, vector<1x128xf32>,
    %c0_25 = arith.constant 0 : index
    %c0_26 = arith.constant 0 : index
    %48 = vector.load %arg11[%c0_25, %c0_26] : memref<1x128xf32, #tpu.memory_space<vmem>>, vector<1x128xf32>
    tpu.vector_store %arg11[%c0_25, %c0_26], %42 {strides = array<i32>} : memref<1x128xf32, #tpu.memory_space<vmem>>, vector<1x128xf32>,
    %49 = arith.truncf %44 : vector<1x128xf32> to vector<1x128xbf16>
    %c0_27 = arith.constant 0 : index
    %c0_28 = arith.constant 0 : index
    %50 = vector.load %arg7[%c0_27, %c0_28] : memref<128x128xbf16, #tpu.memory_space<vmem>>, vector<128x128xbf16>
    %cst_29 = arith.constant dense<0.000000e+00> : vector<1x128xf32>
    %51 = tpu.matmul %49, %50, %cst_29 {dimension_numbers = #tpu.dot_dimension_numbers<[1], [0], [0], [1], [0, 0, 1, 1], [], []>} : vector<1x128xbf16>, vector<128x128xbf16>, vector<1x128xf32> -> vector<1x128xf32>
    %c0_30 = arith.constant 0 : index
    %c0_31 = arith.constant 0 : index
    %52 = vector.load %arg8[%c0_30, %c0_31] : memref<1x128xf32, #tpu.memory_space<vmem>>, vector<1x128xf32>
    %53 = arith.addf %51, %52 : vector<1x128xf32>
    %cst_32 = arith.constant dense<0xFF800000> : vector<1xf32>
    %54 = vector.multi_reduction <maximumf>, %53, %cst_32 [1] : vector<1x128xf32> to vector<1xf32>
    %55 = vector.shape_cast %54 : vector<1xf32> to vector<1x1xf32>
    %56 = vector.broadcast %55 : vector<1x1xf32> to vector<1x128xf32>
    %57 = arith.subf %53, %56 : vector<1x128xf32>
    %58 = math.exp %57 : vector<1x128xf32>
    %cst_33 = arith.constant dense<0.000000e+00> : vector<1xf32>
    %59 = vector.multi_reduction <add>, %58, %cst_33 [1] : vector<1x128xf32> to vector<1xf32>
    %60 = vector.shape_cast %59 : vector<1xf32> to vector<1x1xf32>
    %61 = math.log %60 : vector<1x1xf32>
    %62 = arith.addf %61, %55 : vector<1x1xf32>
    %63 = vector.broadcast %62 : vector<1x1xf32> to vector<1x128xf32>
    %64 = arith.subf %53, %63 : vector<1x128xf32>
    %c0_34 = arith.constant 0 : index
    %c0_35 = arith.constant 0 : index
    %c0_36 = arith.constant 0 : index
    %65 = vector.load %arg9[%c0_34, %c0_35, %c0_36] : memref<1x1x128xf32, #tpu.memory_space<vmem>>, vector<1x1x128xf32>
    %66 = vector.shape_cast %65 : vector<1x1x128xf32> to vector<1x128xf32>
    %67 = vector.shape_cast %64 : vector<1x128xf32> to vector<1x1x128xf32>
    tpu.vector_store %arg9[%c0_34, %c0_35, %c0_36], %67 {strides = array<i32>} : memref<1x1x128xf32, #tpu.memory_space<vmem>>, vector<1x1x128xf32>,
    return
  }
  func.func @transform_0(%arg0: i32, %arg1: memref<1xi32, #tpu.memory_space<smem>>) -> (i32, i32, i32) {
    %c0_i32 = arith.constant 0 : i32
    %c0_i32_0 = arith.constant 0 : i32
    %c0_i32_1 = arith.constant 0 : i32
    %c0_i32_2 = arith.constant 0 : i32
    return %c0_i32, %c0_i32_0, %c0_i32_1 : i32, i32, i32
  }
  func.func @transform_1(%arg0: i32, %arg1: memref<1xi32, #tpu.memory_space<smem>>) -> (i32, i32) {
    %c0_i32 = arith.constant 0 : i32
    %c0_i32_0 = arith.constant 0 : i32
    %c0_i32_1 = arith.constant 0 : i32
    return %c0_i32, %c0_i32_0 : i32, i32
  }
  func.func @transform_2(%arg0: i32, %arg1: memref<1xi32, #tpu.memory_space<smem>>) -> (i32, i32) {
    %c0_i32 = arith.constant 0 : i32
    %c0_i32_0 = arith.constant 0 : i32
    %c0_i32_1 = arith.constant 0 : i32
    return %c0_i32, %c0_i32_0 : i32, i32
  }
  func.func @transform_3(%arg0: i32, %arg1: memref<1xi32, #tpu.memory_space<smem>>) -> (i32, i32) {
    %c0_i32 = arith.constant 0 : i32
    %c0_i32_0 = arith.constant 0 : i32
    %c0_i32_1 = arith.constant 0 : i32
    return %c0_i32, %c0_i32_0 : i32, i32
  }
  func.func @transform_4(%arg0: i32, %arg1: memref<1xi32, #tpu.memory_space<smem>>) -> (i32, i32) {
    %c0_i32 = arith.constant 0 : i32
    %c0_i32_0 = arith.constant 0 : i32
    %c0_i32_1 = arith.constant 0 : i32
    return %c0_i32, %c0_i32_0 : i32, i32
  }
  func.func @transform_5(%arg0: i32, %arg1: memref<1xi32, #tpu.memory_space<smem>>) -> (i32, i32) {
    %c0_i32 = arith.constant 0 : i32
    %c0_i32_0 = arith.constant 0 : i32
    %c0_i32_1 = arith.constant 0 : i32
    return %c0_i32, %c0_i32_0 : i32, i32
  }
  func.func @transform_6(%arg0: i32, %arg1: memref<1xi32, #tpu.memory_space<smem>>) -> (i32, i32) {
    %c0_i32 = arith.constant 0 : i32
    %c0_i32_0 = arith.constant 0 : i32
    %c0_i32_1 = arith.constant 0 : i32
    return %c0_i32, %c0_i32_0 : i32, i32
  }
  func.func @transform_7(%arg0: i32, %arg1: memref<1xi32, #tpu.memory_space<smem>>) -> (i32, i32, i32) {
    %c0_i32 = arith.constant 0 : i32
    %c0_i32_0 = arith.constant 0 : i32
    %c0_i32_1 = arith.constant 0 : i32
    return %arg0, %c0_i32, %c0_i32_0 : i32, i32, i32
  }
  func.func @transform_8(%arg0: i32, %arg1: memref<1xi32, #tpu.memory_space<smem>>) -> (i32, i32) {
    %c0_i32 = arith.constant 0 : i32
    %c0_i32_0 = arith.constant 0 : i32
    %c0_i32_1 = arith.constant 0 : i32
    return %c0_i32, %c0_i32_0 : i32, i32
  }
  func.func @transform_9(%arg0: i32, %arg1: memref<1xi32, #tpu.memory_space<smem>>) -> (i32, i32) {
    %c0_i32 = arith.constant 0 : i32
    %c0_i32_0 = arith.constant 0 : i32
    %c0_i32_1 = arith.constant 0 : i32
    return %c0_i32, %c0_i32_0 : i32, i32
  }
}

</mosaic_0001>

<llo_original>
// kernel: tpu_custom_call.1
$region0: #{tpu_custom_call.1}
  #allocation0 [shape = 'u32[]', space=smem, size = 0x4, offset = 0x4, fixed_abs, tag = 'smem constant byte address 0x4 - core index']
  #allocation1 [shape = 'u32[144,128]{1,0:T(1,128)}', space=vmem, size = 0x12000, scoped, tag = 'internal scratch']
  #allocation2 [shape = 'f32[1,128]{1,0:T(1,128)}', space=vmem, size = 0x200, scoped, tag = 'scratch operand']
  #allocation3 [shape = 'f32[1,128]{1,0:T(1,128)}', space=vmem, size = 0x200, scoped, tag = 'scratch operand']
  #allocation4 [shape = 'bf16[1,256]{1,0:T(2,128)(2,1)}', space=vmem, size = 0x400, scoped, tag = 'scratch operand']
  #allocation5 [shape = 's32[1]{0}', space=sflag, size = 0x4, scoped, tag = 'scoped memory for tpu_custom_call.1']
  #allocation6 [shape = 's32[1]{0:T(128)S(6)}', space=smem, size = 0x200, scoped, tag = 'prefetched SMEM operand 0']
  %s0 = inlined_call_operand.<no memory space> [shape: s32[1], index: 0, kind: input, shape index: {}]
  %s1 = inlined_call_operand.vmem [shape: bf16[64,1,128], index: 1, kind: input, shape index: {}]
  %s2 = inlined_call_operand.hbm [shape: bf16[256,512], index: 2, kind: input, shape index: {}]
  %s3 = inlined_call_operand.vmem [shape: f32[1,512], index: 3, kind: input, shape index: {}]
  %s4 = inlined_call_operand.vmem [shape: f32[1,128], index: 4, kind: input, shape index: {}]
  %s5 = inlined_call_operand.vmem [shape: f32[1,128], index: 5, kind: input, shape index: {}]
  %s6 = inlined_call_operand.vmem [shape: bf16[128,128], index: 6, kind: input, shape index: {}]
  %s7 = inlined_call_operand.vmem [shape: f32[1,128], index: 7, kind: input, shape index: {}]
  %s8 = inlined_call_operand.hbm [shape: f32[1,1,128], index: 8, kind: output, shape index: {0}]
  %s9 = inlined_call_operand.hbm [shape: f32[1,128], index: 9, kind: output, shape index: {1}]
  %s10 = inlined_call_operand.hbm [shape: f32[1,128], index: 10, kind: output, shape index: {2}]
  %11 = xla_tuple %s8, %s9, %s10
  %s12 = sld [smem:[#allocation0]]
  $region62: #{tpu_custom_call.1} parent=0
    _
  %s14 = ssub.s32 1, %s12
  %s15 = scalar_select 0, %s14, %s12
  %16 = sst [smem:[#allocation6]] %s0
  $region1: #{tpu_custom_call.1} parent=0
    #allocation7 [shape = 'u8[262144]{0}', space=vmem, size = 0x40000, scoped, tag = 'input window, operand 2, single buffered']
    #allocation8 [shape = 's32[1]{0}', space=sflag, size = 0x4, scoped, tag = 'scoped memory for tpu_custom_call.1']
    #allocation9 [shape = 's32[1]{0}', space=sflag, size = 0x4, scoped, tag = 'scoped memory for tpu_custom_call.1']
    #allocation10 [shape = 'u8[512]{0}', space=vmem, size = 0x400, scoped, tag = 'output window, operand 0, single buffered']
    #allocation11 [shape = 'u8[512]{0}', space=vmem, size = 0x400, scoped, tag = 'output window, operand 1, single buffered']
    #allocation12 [shape = 's32[1]{0}', space=sflag, size = 0x4, scoped, tag = 'scoped memory for tpu_custom_call.1']
    #allocation13 [shape = 'u8[512]{0}', space=vmem, size = 0x400, scoped, tag = 'output window, operand 2, single buffered']
    %17 = vsyncpa [#allocation8], 0
    %18 = vsyncpa [#allocation9], 0
    %19 = vsyncpa [#allocation12], 0
    // Predicated region
    $region2: #{tpu_custom_call.1} parent=1 // pred_check
      _
    $region3: #{tpu_custom_call.1} parent=1 // pred_check_branch
      %21 = sbr.rel (0) target = $region5
    $region4: #{tpu_custom_call.1} parent=1 // pred_region
      _
    $region5: #{tpu_custom_call.1} parent=1 // pred_fallthru
      _
    // Predicated region
    $region6: #{tpu_custom_call.1} parent=1 // pred_check
      _
    $region7: #{tpu_custom_call.1} parent=1 // pred_check_branch
      %23 = sbr.rel (0) target = $region9
    $region8: #{tpu_custom_call.1} parent=1 // pred_region
      %s25 = ssub.s32 8192, 8192
      %26 = vsyncadd [#allocation8], %s25
      %s27 = sshll.u32 [#allocation7], 4
      %s28 = int_to_ptr.vmem [resolvable:$true] %s27
      %33 = dma.hbm_to_vmem [thread:$0]  %s2, 8192, %s28, [#allocation8], 256, 256, 16
    $region9: #{tpu_custom_call.1} parent=1 // pred_fallthru
      _
    // Predicated region
    $region10: #{tpu_custom_call.1} parent=1 // pred_check
      _
    $region11: #{tpu_custom_call.1} parent=1 // pred_check_branch
      %35 = sbr.rel (0) target = $region13
    $region12: #{tpu_custom_call.1} parent=1 // pred_region
      _
    $region13: #{tpu_custom_call.1} parent=1 // pred_fallthru
      _
    // Predicated region
    $region14: #{tpu_custom_call.1} parent=1 // pred_check
      _
    $region15: #{tpu_custom_call.1} parent=1 // pred_check_branch
      %37 = sbr.rel (0) target = $region17
    $region16: #{tpu_custom_call.1} parent=1 // pred_region
      _
    $region17: #{tpu_custom_call.1} parent=1 // pred_fallthru
      _
    // Predicated region
    $region18: #{tpu_custom_call.1} parent=1 // pred_check
      _
    $region19: #{tpu_custom_call.1} parent=1 // pred_check_branch
      %39 = sbr.rel (0) target = $region21
    $region20: #{tpu_custom_call.1} parent=1 // pred_region
      _
    $region21: #{tpu_custom_call.1} parent=1 // pred_fallthru
      _
    // Predicated region
    $region22: #{tpu_custom_call.1} parent=1 // pred_check
      _
    $region23: #{tpu_custom_call.1} parent=1 // pred_check_branch
      %41 = sbr.rel (0) target = $region25
    $region24: #{tpu_custom_call.1} parent=1 // pred_region
      _
    $region25: #{tpu_custom_call.1} parent=1 // pred_fallthru
      _
    // Predicated region
    $region26: #{tpu_custom_call.1} parent=1 // pred_check
      _
    $region27: #{tpu_custom_call.1} parent=1 // pred_check_branch
      %43 = sbr.rel (0) target = $region29
    $region28: #{tpu_custom_call.1} parent=1 // pred_region
      _
    $region29: #{tpu_custom_call.1} parent=1 // pred_fallthru
      _
    // Predicated region
    $region30: #{tpu_custom_call.1} parent=1 // pred_check
      _
    $region31: #{tpu_custom_call.1} parent=1 // pred_check_branch
      %45 = sbr.rel (0) target = $region33
    $region32: #{tpu_custom_call.1} parent=1 // pred_region
      %46 = dma.done [#allocation8], 8192
    $region33: #{tpu_custom_call.1} parent=1 // pred_fallthru
      _
    %p48 = scmp.eq.s32.totalorder 0, 0
    // Predicated region
    $region34: #{tpu_custom_call.1} parent=1 // pred_check
      %p49 = pneg %p48
    $region35: #{tpu_custom_call.1} parent=1 // pred_check_branch
      %51 = sbr.rel (%p49) target = $region37
    $region36: #{tpu_custom_call.1} parent=1 // pred_region
      %v52 = vld [vmem:[%s4] sm:$0x1]
      %53 = vst [vmem:[#allocation2] sm:$0x1] %v52
      %v54 = vld [vmem:[%s5] sm:$0x1]
      %55 = vst [vmem:[#allocation3] sm:$0x1] %v54
    $region37: #{tpu_custom_call.1} parent=1 // pred_fallthru
      _
    %s56 = sld [smem:[#allocation6]]
    %s57 = scalar_lea.vmem %s1, %s56
    %v58 = vld [vmem:[%s57] sm:$0x1]
    %v59 = vmax.bf16 %v58, 0
    %v60 = vld [vmem:[#allocation2] sm:$0x1]
    %v61 = vld [vmem:[#allocation3] sm:$0x1]
    %vm62 = vcmask 1040384
    %vm63 = vsmask.f32 256
    %vm64 = vmand %vm62, %vm63
    %v65 = vld [vmem:[#allocation4] sm:$0x1]
    %v66 = vsel %vm64, %v59, %v65
    %67 = vst [vmem:[#allocation4] sm:$0x1] %v66
    %v68 = vpack.c.bf16 %v60, %v60
    %v69 = vld [vmem:[#allocation4 + $0x1] sm:$0x1]
    %v70 = vsel %vm64, %v68, %v69
    %71 = vst [vmem:[#allocation4 + $0x1] sm:$0x1] %v70
    %v72 = vld [vmem:[#allocation4] sm:$0x3]
    %v73 = vld [vmem:[#allocation7] sm:$0xff]
    %v74 = vld [vmem:[#allocation7 + $0x8] sm:$0xff]
    %v75 = vld [vmem:[#allocation7 + $0x10] sm:$0xff]
    %v76 = vld [vmem:[#allocation7 + $0x18] sm:$0xff]
    %v77 = vld [vmem:[#allocation7 + $0x20] sm:$0xff]
    %v78 = vld [vmem:[#allocation7 + $0x28] sm:$0xff]
    %v79 = vld [vmem:[#allocation7 + $0x30] sm:$0xff]
    %v80 = vld [vmem:[#allocation7 + $0x38] sm:$0xff]
    %v81 = vld [vmem:[#allocation7 + $0x40] sm:$0xff]
    %v82 = vld [vmem:[#allocation7 + $0x48] sm:$0xff]
    %v83 = vld [vmem:[#allocation7 + $0x50] sm:$0xff]
    %v84 = vld [vmem:[#allocation7 + $0x58] sm:$0xff]
    %v85 = vld [vmem:[#allocation7 + $0x60] sm:$0xff]
    %v86 = vld [vmem:[#allocation7 + $0x68] sm:$0xff]
    %v87 = vld [vmem:[#allocation7 + $0x70] sm:$0xff]
    %v88 = vld [vmem:[#allocation7 + $0x78] sm:$0xff]
    %v89 = vld [vmem:[#allocation7 + $0x80] sm:$0xff]
    %v90 = vld [vmem:[#allocation7 + $0x88] sm:$0xff]
    %v91 = vld [vmem:[#allocation7 + $0x90] sm:$0xff]
    %v92 = vld [vmem:[#allocation7 + $0x98] sm:$0xff]
    %v93 = vld [vmem:[#allocation7 + $0xa0] sm:$0xff]
    %v94 = vld [vmem:[#allocation7 + $0xa8] sm:$0xff]
    %v95 = vld [vmem:[#allocation7 + $0xb0] sm:$0xff]
    %v96 = vld [vmem:[#allocation7 + $0xb8] sm:$0xff]
    %v97 = vld [vmem:[#allocation7 + $0xc0] sm:$0xff]
    %v98 = vld [vmem:[#allocation7 + $0xc8] sm:$0xff]
    %v99 = vld [vmem:[#allocation7 + $0xd0] sm:$0xff]
    %v100 = vld [vmem:[#allocation7 + $0xd8] sm:$0xff]
    %v101 = vld [vmem:[#allocation7 + $0xe0] sm:$0xff]
    %v102 = vld [vmem:[#allocation7 + $0xe8] sm:$0xff]
    %v103 = vld [vmem:[#allocation7 + $0xf0] sm:$0xff]
    %v104 = vld [vmem:[#allocation7 + $0xf8] sm:$0xff]
    %v105 = vld [vmem:[#allocation7 + $0x100] sm:$0xff]
    %v106 = vld [vmem:[#allocation7 + $0x108] sm:$0xff]
    %v107 = vld [vmem:[#allocation7 + $0x110] sm:$0xff]
    %v108 = vld [vmem:[#allocation7 + $0x118] sm:$0xff]
    %v109 = vld [vmem:[#allocation7 + $0x120] sm:$0xff]
    %v110 = vld [vmem:[#allocation7 + $0x128] sm:$0xff]
    %v111 = vld [vmem:[#allocation7 + $0x130] sm:$0xff]
    %v112 = vld [vmem:[#allocation7 + $0x138] sm:$0xff]
    %v113 = vld [vmem:[#allocation7 + $0x140] sm:$0xff]
    %v114 = vld [vmem:[#allocation7 + $0x148] sm:$0xff]
    %v115 = vld [vmem:[#allocation7 + $0x150] sm:$0xff]
    %v116 = vld [vmem:[#allocation7 + $0x158] sm:$0xff]
    %v117 = vld [vmem:[#allocation7 + $0x160] sm:$0xff]
    %v118 = vld [vmem:[#allocation7 + $0x168] sm:$0xff]
    %v119 = vld [vmem:[#allocation7 + $0x170] sm:$0xff]
    %v120 = vld [vmem:[#allocation7 + $0x178] sm:$0xff]
    %v121 = vld [vmem:[#allocation7 + $0x180] sm:$0xff]
    %v122 = vld [vmem:[#allocation7 + $0x188] sm:$0xff]
    %v123 = vld [vmem:[#allocation7 + $0x190] sm:$0xff]
    %v124 = vld [vmem:[#allocation7 + $0x198] sm:$0xff]
    %v125 = vld [vmem:[#allocation7 + $0x1a0] sm:$0xff]
    %v126 = vld [vmem:[#allocation7 + $0x1a8] sm:$0xff]
    %v127 = vld [vmem:[#allocation7 + $0x1b0] sm:$0xff]
    %v128 = vld [vmem:[#allocation7 + $0x1b8] sm:$0xff]
    %v129 = vld [vmem:[#allocation7 + $0x1c0] sm:$0xff]
    %v130 = vld [vmem:[#allocation7 + $0x1c8] sm:$0xff]
    %v131 = vld [vmem:[#allocation7 + $0x1d0] sm:$0xff]
    %v132 = vld [vmem:[#allocation7 + $0x1d8] sm:$0xff]
    %v133 = vld [vmem:[#allocation7 + $0x1e0] sm:$0xff]
    %v134 = vld [vmem:[#allocation7 + $0x1e8] sm:$0xff]
    %v135 = vld [vmem:[#allocation7 + $0x1f0] sm:$0xff]
    %v136 = vld [vmem:[#allocation7 + $0x1f8] sm:$0xff]
    %v137 = vld [vmem:[%s3] sm:$0xf]
    %v140 = vunpack.c.l.s4 1966171168
    %v141 = vunpack.c.0.s8 %v140
    %v142 = vlaneseq
    %v143 = vshrl.u32 %v142, 7
    %v144 = vsub.s32 %v141, %v143
    %v145 = vrot.slane %v72, %v144
    %v146 = vcombine.high %v145, %v145
    %v148 = vunpack.c.l.s4 1966171168
    %v149 = vunpack.c.0.s8 %v148
    %v150 = vlaneseq
    %v151 = vshrl.u32 %v150, 7
    %v152 = vsub.s32 %v149, %v151
    %v153 = vrot.slane %v145, %v152
    %v155 = vunpack.c.l.s4 1966171168
    %v156 = vunpack.c.0.s8 %v155
    %v157 = vlaneseq
    %v158 = vshrl.u32 %v157, 7
    %v159 = vsub.s32 %v156, %v158
    %v160 = vrot.slane %v146, %v159
    %v227 = vunpack.c.l.b16 %v73
    %v228 = vunpack.c.h.b16 %v73
    %v229 = vunpack.c.l.b16 %v74
    %v230 = vunpack.c.h.b16 %v74
    %v231 = vunpack.c.l.b16 %v75
    %v232 = vunpack.c.h.b16 %v75
    %v233 = vunpack.c.l.b16 %v76
    %v234 = vunpack.c.h.b16 %v76
    %v235 = vunpack.c.l.b16 %v77
    %v236 = vunpack.c.h.b16 %v77
    %v237 = vunpack.c.l.b16 %v78
    %v238 = vunpack.c.h.b16 %v78
    %v239 = vunpack.c.l.b16 %v79
    %v240 = vunpack.c.h.b16 %v79
    %v241 = vunpack.c.l.b16 %v80
    %v242 = vunpack.c.h.b16 %v80
    %v243 = vunpack.c.l.b16 %v81
    %v244 = vunpack.c.h.b16 %v81
    %v245 = vunpack.c.l.b16 %v82
    %v246 = vunpack.c.h.b16 %v82
    %v247 = vunpack.c.l.b16 %v83
    %v248 = vunpack.c.h.b16 %v83
    %v249 = vunpack.c.l.b16 %v84
    %v250 = vunpack.c.h.b16 %v84
    %v251 = vunpack.c.l.b16 %v85
    %v252 = vunpack.c.h.b16 %v85
    %v253 = vunpack.c.l.b16 %v86
    %v254 = vunpack.c.h.b16 %v86
    %v255 = vunpack.c.l.b16 %v87
    %v256 = vunpack.c.h.b16 %v87
    %v257 = vunpack.c.l.b16 %v88
    %v258 = vunpack.c.h.b16 %v88
    %v259 = vunpack.c.l.b16 %v89
    %v260 = vunpack.c.h.b16 %v89
    %v261 = vunpack.c.l.b16 %v90
    %v262 = vunpack.c.h.b16 %v90
    %v263 = vunpack.c.l.b16 %v91
    %v264 = vunpack.c.h.b16 %v91
    %v265 = vunpack.c.l.b16 %v92
    %v266 = vunpack.c.h.b16 %v92
    %v267 = vunpack.c.l.b16 %v93
    %v268 = vunpack.c.h.b16 %v93
    %v269 = vunpack.c.l.b16 %v94
    %v270 = vunpack.c.h.b16 %v94
    %v271 = vunpack.c.l.b16 %v95
    %v272 = vunpack.c.h.b16 %v95
    %v273 = vunpack.c.l.b16 %v96
    %v274 = vunpack.c.h.b16 %v96
    %v275 = vunpack.c.l.b16 %v97
    %v276 = vunpack.c.h.b16 %v97
    %v277 = vunpack.c.l.b16 %v98
    %v278 = vunpack.c.h.b16 %v98
    %v279 = vunpack.c.l.b16 %v99
    %v280 = vunpack.c.h.b16 %v99
    %v281 = vunpack.c.l.b16 %v100
    %v282 = vunpack.c.h.b16 %v100
    %v283 = vunpack.c.l.b16 %v101
    %v284 = vunpack.c.h.b16 %v101
    %v285 = vunpack.c.l.b16 %v102
    %v286 = vunpack.c.h.b16 %v102
    %v287 = vunpack.c.l.b16 %v103
    %v288 = vunpack.c.h.b16 %v103
    %v289 = vunpack.c.l.b16 %v104
    %v290 = vunpack.c.h.b16 %v104
    %v291 = vunpack.c.l.b16 %v105
    %v292 = vunpack.c.h.b16 %v105
    %v293 = vunpack.c.l.b16 %v106
    %v294 = vunpack.c.h.b16 %v106
    %v295 = vunpack.c.l.b16 %v107
    %v296 = vunpack.c.h.b16 %v107
    %v297 = vunpack.c.l.b16 %v108
    %v298 = vunpack.c.h.b16 %v108
    %v299 = vunpack.c.l.b16 %v109
    %v300 = vunpack.c.h.b16 %v109
    %v301 = vunpack.c.l.b16 %v110
    %v302 = vunpack.c.h.b16 %v110
    %v303 = vunpack.c.l.b16 %v111
    %v304 = vunpack.c.h.b16 %v111
    %v305 = vunpack.c.l.b16 %v112
    %v306 = vunpack.c.h.b16 %v112
    %v307 = vunpack.c.l.b16 %v113
    %v308 = vunpack.c.h.b16 %v113
    %v309 = vunpack.c.l.b16 %v114
    %v310 = vunpack.c.h.b16 %v114
    %v311 = vunpack.c.l.b16 %v115
    %v312 = vunpack.c.h.b16 %v115
    %v313 = vunpack.c.l.b16 %v116
    %v314 = vunpack.c.h.b16 %v116
    %v315 = vunpack.c.l.b16 %v117
    %v316 = vunpack.c.h.b16 %v117
    %v317 = vunpack.c.l.b16 %v118
    %v318 = vunpack.c.h.b16 %v118
    %v319 = vunpack.c.l.b16 %v119
    %v320 = vunpack.c.h.b16 %v119
    %v321 = vunpack.c.l.b16 %v120
    %v322 = vunpack.c.h.b16 %v120
    %v323 = vunpack.c.l.b16 %v121
    %v324 = vunpack.c.h.b16 %v121
    %v325 = vunpack.c.l.b16 %v122
    %v326 = vunpack.c.h.b16 %v122
    %v327 = vunpack.c.l.b16 %v123
    %v328 = vunpack.c.h.b16 %v123
    %v329 = vunpack.c.l.b16 %v124
    %v330 = vunpack.c.h.b16 %v124
    %v331 = vunpack.c.l.b16 %v125
    %v332 = vunpack.c.h.b16 %v125
    %v333 = vunpack.c.l.b16 %v126
    %v334 = vunpack.c.h.b16 %v126
    %v335 = vunpack.c.l.b16 %v127
    %v336 = vunpack.c.h.b16 %v127
    %v337 = vunpack.c.l.b16 %v128
    %v338 = vunpack.c.h.b16 %v128
    %v339 = vunpack.c.l.b16 %v129
    %v340 = vunpack.c.h.b16 %v129
    %v341 = vunpack.c.l.b16 %v130
    %v342 = vunpack.c.h.b16 %v130
    %v343 = vunpack.c.l.b16 %v131
    %v344 = vunpack.c.h.b16 %v131
    %v345 = vunpack.c.l.b16 %v132
    %v346 = vunpack.c.h.b16 %v132
    %v347 = vunpack.c.l.b16 %v133
    %v348 = vunpack.c.h.b16 %v133
    %v349 = vunpack.c.l.b16 %v134
    %v350 = vunpack.c.h.b16 %v134
    %v351 = vunpack.c.l.b16 %v135
    %v352 = vunpack.c.h.b16 %v135
    %v353 = vunpack.c.l.b16 %v136
    %v354 = vunpack.c.h.b16 %v136
    %v355 = vpack.c.b16 %v231, %v227
    %v356 = vpack.c.b16 %v232, %v228
    %v357 = vpack.c.b16 %v233, %v229
    %v358 = vpack.c.b16 %v234, %v230
    %v359 = vpack.c.b16 %v239, %v235
    %v360 = vpack.c.b16 %v240, %v236
    %v361 = vpack.c.b16 %v241, %v237
    %v362 = vpack.c.b16 %v242, %v238
    %v363 = vpack.c.b16 %v247, %v243
    %v364 = vpack.c.b16 %v248, %v244
    %v365 = vpack.c.b16 %v249, %v245
    %v366 = vpack.c.b16 %v250, %v246
    %v367 = vpack.c.b16 %v255, %v251
    %v368 = vpack.c.b16 %v256, %v252
    %v369 = vpack.c.b16 %v257, %v253
    %v370 = vpack.c.b16 %v258, %v254
    %v371 = vpack.c.b16 %v263, %v259
    %v372 = vpack.c.b16 %v264, %v260
    %v373 = vpack.c.b16 %v265, %v261
    %v374 = vpack.c.b16 %v266, %v262
    %v375 = vpack.c.b16 %v271, %v267
    %v376 = vpack.c.b16 %v272, %v268
    %v377 = vpack.c.b16 %v273, %v269
    %v378 = vpack.c.b16 %v274, %v270
    %v379 = vpack.c.b16 %v279, %v275
    %v380 = vpack.c.b16 %v280, %v276
    %v381 = vpack.c.b16 %v281, %v277
    %v382 = vpack.c.b16 %v282, %v278
    %v383 = vpack.c.b16 %v287, %v283
    %v384 = vpack.c.b16 %v288, %v284
    %v385 = vpack.c.b16 %v289, %v285
    %v386 = vpack.c.b16 %v290, %v286
    %v387 = vpack.c.b16 %v295, %v291
    %v388 = vpack.c.b16 %v296, %v292
    %v389 = vpack.c.b16 %v297, %v293
    %v390 = vpack.c.b16 %v298, %v294
    %v391 = vpack.c.b16 %v303, %v299
    %v392 = vpack.c.b16 %v304, %v300
    %v393 = vpack.c.b16 %v305, %v301
    %v394 = vpack.c.b16 %v306, %v302
    %v395 = vpack.c.b16 %v311, %v307
    %v396 = vpack.c.b16 %v312, %v308
    %v397 = vpack.c.b16 %v313, %v309
    %v398 = vpack.c.b16 %v314, %v310
    %v399 = vpack.c.b16 %v319, %v315
    %v400 = vpack.c.b16 %v320, %v316
    %v401 = vpack.c.b16 %v321, %v317
    %v402 = vpack.c.b16 %v322, %v318
    %v403 = vpack.c.b16 %v327, %v323
    %v404 = vpack.c.b16 %v328, %v324
    %v405 = vpack.c.b16 %v329, %v325
    %v406 = vpack.c.b16 %v330, %v326
    %v407 = vpack.c.b16 %v335, %v331
    %v408 = vpack.c.b16 %v336, %v332
    %v409 = vpack.c.b16 %v337, %v333
    %v410 = vpack.c.b16 %v338, %v334
    %v411 = vpack.c.b16 %v343, %v339
    %v412 = vpack.c.b16 %v344, %v340
    %v413 = vpack.c.b16 %v345, %v341
    %v414 = vpack.c.b16 %v346, %v342
    %v415 = vpack.c.b16 %v351, %v347
    %v416 = vpack.c.b16 %v352, %v348
    %v417 = vpack.c.b16 %v353, %v349
    %v418 = vpack.c.b16 %v354, %v350
    %v484 = vlaneseq
    %v485 = vshrl.u32 %v484, 7
    %v486 = vsub.s32 0, %v485
    %v487 = vrot.slane %v137, %v486
    %v488 = vlaneseq
    %v489 = vshrl.u32 %v488, 7
    %v490 = vsub.s32 1, %v489
    %v491 = vrot.slane %v137, %v490
    %v492 = vlaneseq
    %v493 = vshrl.u32 %v492, 7
    %v494 = vsub.s32 2, %v493
    %v495 = vrot.slane %v137, %v494
    %v496 = vlaneseq
    %v497 = vshrl.u32 %v496, 7
    %v498 = vsub.s32 3, %v497
    %v499 = vrot.slane %v137, %v498
    %504 = vmatprep.subr.bf16.mxu0 %v384
    %505 = vmatpush1.bf16.msra.mxu0 %v383
    %506 = vmatprep.subr.bf16.mxu0 %v380
    %507 = vmatpush1.bf16.msra.mxu0 %v379
    %508 = vmatprep.subr.bf16.mxu0 %v376
    %509 = vmatpush1.bf16.msra.mxu0 %v375
    %510 = vmatprep.subr.bf16.mxu0 %v372
    %511 = vmatpush1.bf16.msra.mxu0 %v371
    %512 = vmatprep.subr.bf16.mxu0 %v368
    %513 = vmatpush1.bf16.msra.mxu0 %v367
    %514 = vmatprep.subr.bf16.mxu0 %v364
    %515 = vmatpush1.bf16.msra.mxu0 %v363
    %516 = vmatprep.subr.bf16.mxu0 %v360
    %517 = vmatpush1.bf16.msra.mxu0 %v359
    %518 = vmatprep.subr.bf16.mxu0 %v356
    %519 = vmatpush1.bf16.msra.mxu0 %v355
    %520 = vmatprep.subr.bf16.mxu0 %v416
    %521 = vmatpush2.bf16.msra.mxu0 %v415
    %522 = vmatprep.subr.bf16.mxu0 %v412
    %523 = vmatpush2.bf16.msra.mxu0 %v411
    %524 = vmatprep.subr.bf16.mxu0 %v408
    %525 = vmatpush2.bf16.msra.mxu0 %v407
    %526 = vmatprep.subr.bf16.mxu0 %v404
    %527 = vmatpush2.bf16.msra.mxu0 %v403
    %528 = vmatprep.subr.bf16.mxu0 %v400
    %529 = vmatpush2.bf16.msra.mxu0 %v399
    %530 = vmatprep.subr.bf16.mxu0 %v396
    %531 = vmatpush2.bf16.msra.mxu0 %v395
    %532 = vmatprep.subr.bf16.mxu0 %v392
    %533 = vmatpush2.bf16.msra.mxu0 %v391
    %534 = vmatprep.subr.bf16.mxu0 %v388
    %535 = vmatpush2.bf16.msra.mxu0 %v387
    %536 = vmatprep.mubr.bf16.mxu0 %v160
    %537 = vmatmul.mubr.bf16.gmra.mxu0 %v153
    %v538 = vpop.f32.mrf.mxu0
    %v539 = vadd.f32 %v487, %v538
    %v540 = vpop.f32.mrf.mxu0
    %v541 = vadd.f32 %v491, %v540
    %v542 = vpop.f32.mrf.mxu0
    %v543 = vpop.f32.mrf.mxu0
    %544 = vdwg.mxu0
    %545 = vmatprep.subr.bf16.mxu0 %v386
    %546 = vmatpush1.bf16.msra.mxu0 %v385
    %547 = vmatprep.subr.bf16.mxu0 %v382
    %548 = vmatpush1.bf16.msra.mxu0 %v381
    %549 = vmatprep.subr.bf16.mxu0 %v378
    %550 = vmatpush1.bf16.msra.mxu0 %v377
    %551 = vmatprep.subr.bf16.mxu0 %v374
    %552 = vmatpush1.bf16.msra.mxu0 %v373
    %553 = vmatprep.subr.bf16.mxu0 %v370
    %554 = vmatpush1.bf16.msra.mxu0 %v369
    %555 = vmatprep.subr.bf16.mxu0 %v366
    %556 = vmatpush1.bf16.msra.mxu0 %v365
    %557 = vmatprep.subr.bf16.mxu0 %v362
    %558 = vmatpush1.bf16.msra.mxu0 %v361
    %559 = vmatprep.subr.bf16.mxu0 %v358
    %560 = vmatpush1.bf16.msra.mxu0 %v357
    %561 = vmatprep.subr.bf16.mxu0 %v418
    %562 = vmatpush2.bf16.msra.mxu0 %v417
    %563 = vmatprep.subr.bf16.mxu0 %v414
    %564 = vmatpush2.bf16.msra.mxu0 %v413
    %565 = vmatprep.subr.bf16.mxu0 %v410
    %566 = vmatpush2.bf16.msra.mxu0 %v409
    %567 = vmatprep.subr.bf16.mxu0 %v406
    %568 = vmatpush2.bf16.msra.mxu0 %v405
    %569 = vmatprep.subr.bf16.mxu0 %v402
    %570 = vmatpush2.bf16.msra.mxu0 %v401
    %571 = vmatprep.subr.bf16.mxu0 %v398
    %572 = vmatpush2.bf16.msra.mxu0 %v397
    %573 = vmatprep.subr.bf16.mxu0 %v394
    %574 = vmatpush2.bf16.msra.mxu0 %v393
    %575 = vmatprep.subr.bf16.mxu0 %v390
    %576 = vmatpush2.bf16.msra.mxu0 %v389
    %577 = vmatprep.mubr.bf16.mxu0 %v160
    %578 = vmatmul.mubr.bf16.gmra.mxu0 %v153
    %v579 = vpop.f32.mrf.mxu0
    %v580 = vadd.f32 %v495, %v579
    %v581 = vpop.f32.mrf.mxu0
    %v582 = vadd.f32 %v499, %v581
    %v583 = vpop.f32.mrf.mxu0
    %v584 = vpop.f32.mrf.mxu0
    %585 = vdwg.mxu0
    %v586 = vxor.u32 %v539, 2147483648
    %v587 = vmul.f32 %v586, 1.442695
    %v588 = vpow.pop %v587
    %v589 = vadd.f32 %v588, 1.0
    %v590 = vrcp.pop %v589
    %v591 = vmul.f32 1.0, %v590
    %v592 = vxor.u32 %v541, 2147483648
    %v593 = vmul.f32 %v592, 1.442695
    %v594 = vpow.pop %v593
    %v595 = vadd.f32 %v594, 1.0
    %v596 = vrcp.pop %v595
    %v597 = vmul.f32 1.0, %v596
    %v598 = vtanh.pop %v580
    %v599 = vxor.u32 %v582, 2147483648
    %v600 = vmul.f32 %v599, 1.442695
    %v601 = vpow.pop %v600
    %v602 = vadd.f32 %v601, 1.0
    %v603 = vrcp.pop %v602
    %v604 = vmul.f32 1.0, %v603
    %v605 = vmul.f32 %v597, %v61
    %v606 = vmul.f32 %v591, %v598
    %v607 = vadd.f32 %v605, %v606
    %v608 = vtanh.pop %v607
    %v609 = vmul.f32 %v604, %v608
    %610 = vst [vmem:[#allocation2] sm:$0x1] %v609
    %611 = vst [vmem:[#allocation3] sm:$0x1] %v607
    %612 = vst [vmem:[#allocation11] sm:$0x1] %v609
    %613 = vst [vmem:[#allocation13] sm:$0x1] %v607
    %v614 = vpack.c.bf16 %v609, %v609
    %v615 = vld [vmem:[%s6] sm:$0xf]
    %v616 = vld [vmem:[%s6 + $0x4] sm:$0xf]
    %v617 = vld [vmem:[%s6 + $0x8] sm:$0xf]
    %v618 = vld [vmem:[%s6 + $0xc] sm:$0xf]
    %v619 = vld [vmem:[%s6 + $0x10] sm:$0xf]
    %v620 = vld [vmem:[%s6 + $0x14] sm:$0xf]
    %v621 = vld [vmem:[%s6 + $0x18] sm:$0xf]
    %v622 = vld [vmem:[%s6 + $0x1c] sm:$0xf]
    %v623 = vld [vmem:[%s6 + $0x20] sm:$0xf]
    %v624 = vld [vmem:[%s6 + $0x24] sm:$0xf]
    %v625 = vld [vmem:[%s6 + $0x28] sm:$0xf]
    %v626 = vld [vmem:[%s6 + $0x2c] sm:$0xf]
    %v627 = vld [vmem:[%s6 + $0x30] sm:$0xf]
    %v628 = vld [vmem:[%s6 + $0x34] sm:$0xf]
    %v629 = vld [vmem:[%s6 + $0x38] sm:$0xf]
    %v630 = vld [vmem:[%s6 + $0x3c] sm:$0xf]
    %v631 = vld [vmem:[%s7] sm:$0x1]
    %v648 = vunpack.c.l.b16 %v615
    %v649 = vunpack.c.l.b16 %v616
    %v650 = vunpack.c.l.b16 %v617
    %v651 = vunpack.c.l.b16 %v618
    %v652 = vunpack.c.l.b16 %v619
    %v653 = vunpack.c.l.b16 %v620
    %v654 = vunpack.c.l.b16 %v621
    %v655 = vunpack.c.l.b16 %v622
    %v656 = vunpack.c.l.b16 %v623
    %v657 = vunpack.c.l.b16 %v624
    %v658 = vunpack.c.l.b16 %v625
    %v659 = vunpack.c.l.b16 %v626
    %v660 = vunpack.c.l.b16 %v627
    %v661 = vunpack.c.l.b16 %v628
    %v662 = vunpack.c.l.b16 %v629
    %v663 = vunpack.c.l.b16 %v630
    %v664 = vpack.c.b16 %v649, %v648
    %v665 = vpack.c.b16 %v651, %v650
    %v666 = vpack.c.b16 %v653, %v652
    %v667 = vpack.c.b16 %v655, %v654
    %v668 = vpack.c.b16 %v657, %v656
    %v669 = vpack.c.b16 %v659, %v658
    %v670 = vpack.c.b16 %v661, %v660
    %v671 = vpack.c.b16 %v663, %v662
    %680 = vmatprep.subr.bf16.mxu0 0
    %681 = vmatpush1.bf16.msra.mxu0 %v671
    %682 = vmatprep.subr.bf16.mxu0 0
    %683 = vmatpush1.bf16.msra.mxu0 %v670
    %684 = vmatprep.subr.bf16.mxu0 0
    %685 = vmatpush1.bf16.msra.mxu0 %v669
    %686 = vmatprep.subr.bf16.mxu0 0
    %687 = vmatpush1.bf16.msra.mxu0 %v668
    %688 = vmatprep.subr.bf16.mxu0 0
    %689 = vmatpush1.bf16.msra.mxu0 %v667
    %690 = vmatprep.subr.bf16.mxu0 0
    %691 = vmatpush1.bf16.msra.mxu0 %v666
    %692 = vmatprep.subr.bf16.mxu0 0
    %693 = vmatpush1.bf16.msra.mxu0 %v665
    %694 = vmatprep.subr.bf16.mxu0 0
    %695 = vmatpush1.bf16.msra.mxu0 %v664
    %696 = vmatprep.subr.bf16.mxu0 0
    %697 = vmatpush2.bf16.msra.mxu0 0
    %698 = vmatprep.subr.bf16.mxu0 0
    %699 = vmatpush2.bf16.msra.mxu0 0
    %700 = vmatprep.subr.bf16.mxu0 0
    %701 = vmatpush2.bf16.msra.mxu0 0
    %702 = vmatprep.subr.bf16.mxu0 0
    %703 = vmatpush2.bf16.msra.mxu0 0
    %704 = vmatprep.subr.bf16.mxu0 0
    %705 = vmatpush2.bf16.msra.mxu0 0
    %706 = vmatprep.subr.bf16.mxu0 0
    %707 = vmatpush2.bf16.msra.mxu0 0
    %708 = vmatprep.subr.bf16.mxu0 0
    %709 = vmatpush2.bf16.msra.mxu0 0
    %710 = vmatprep.subr.bf16.mxu0 0
    %711 = vmatpush2.bf16.msra.mxu0 0
    %712 = vmatprep.mubr.bf16.mxu0 0
    %713 = vmatmul.mubr.bf16.gmra.mxu0 %v614
    %v714 = vpop.f32.mrf.mxu0
    %v715 = vadd.f32 %v631, %v714
    %v716 = vpop.f32.mrf.mxu0
    %v717 = vpop.f32.mrf.mxu0
    %v718 = vpop.f32.mrf.mxu0
    %719 = vdwg.mxu0
    %vm720 = vcmask 1040384
    %v721 = vsel %vm720, %v715, -inf
    %722 = vmax.xlane.f32.xlu0 %v721
    %v723 = vpop.xlane.xlu0 %722
    %v724 = vsub.f32 %v715, %v723
    %v725 = vmul.f32 %v724, 1.442695
    %v726 = vpow.pop %v725
    %v727 = vsel %vm720, %v726, 0.0
    %728 = vadd.xlane.f32.xlu0 %v727
    %v729 = vpop.xlane.xlu0 %728
    %v730 = vlog2.pop %v729
    %v731 = vmul.f32 %v730, 0.6931472
    %v732 = vadd.f32 %v731, %v723
    %v733 = vsub.f32 %v715, %v732
    %734 = vst [vmem:[#allocation10] sm:$0x1] %v733
    // Predicated region
    $region38: #{tpu_custom_call.1} parent=1 // pred_check
      _
    $region39: #{tpu_custom_call.1} parent=1 // pred_check_branch
      %736 = sbr.rel (0) target = $region41
    $region40: #{tpu_custom_call.1} parent=1 // pred_region
      %s738 = ssub.s32 16, 16
      %739 = vsyncadd [#allocation9], %s738
      %s741 = sshll.u32 [#allocation10], 4
      %s742 = int_to_ptr.vmem [resolvable:$true] %s741
      %744 = dma.vmem_to_hbm [thread:$0]  %s742, 16, %s8, [#allocation9]
    $region41: #{tpu_custom_call.1} parent=1 // pred_fallthru
      _
    // Predicated region
    $region42: #{tpu_custom_call.1} parent=1 // pred_check
      _
    $region43: #{tpu_custom_call.1} parent=1 // pred_check_branch
      %746 = sbr.rel (0) target = $region45
    $region44: #{tpu_custom_call.1} parent=1 // pred_region
      %s748 = ssub.s32 16, 16
      %749 = vsyncadd [#allocation12], %s748
      %s751 = sshll.u32 [#allocation11], 4
      %s752 = int_to_ptr.vmem [resolvable:$true] %s751
      %754 = dma.vmem_to_hbm [thread:$0]  %s752, 16, %s9, [#allocation12]
    $region45: #{tpu_custom_call.1} parent=1 // pred_fallthru
      _
    // Predicated region
    $region46: #{tpu_custom_call.1} parent=1 // pred_check
      _
    $region47: #{tpu_custom_call.1} parent=1 // pred_check_branch
      %756 = sbr.rel (0) target = $region49
    $region48: #{tpu_custom_call.1} parent=1 // pred_region
      %s758 = ssub.s32 16, 16
      %759 = vsyncadd [#allocation12], %s758
      %s761 = sshll.u32 [#allocation13], 4
      %s762 = int_to_ptr.vmem [resolvable:$true] %s761
      %764 = dma.vmem_to_hbm [thread:$0]  %s762, 16, %s10, [#allocation12]
    $region49: #{tpu_custom_call.1} parent=1 // pred_fallthru
      _
    // Predicated region
    $region50: #{tpu_custom_call.1} parent=1 // pred_check
      _
    $region51: #{tpu_custom_call.1} parent=1 // pred_check_branch
      %766 = sbr.rel (0) target = $region53
    $region52: #{tpu_custom_call.1} parent=1 // pred_region
      %767 = dma.done [#allocation9], 16
    $region53: #{tpu_custom_call.1} parent=1 // pred_fallthru
      _
    // Predicated region
    $region54: #{tpu_custom_call.1} parent=1 // pred_check
      _
    $region55: #{tpu_custom_call.1} parent=1 // pred_check_branch
      %769 = sbr.rel (0) target = $region57
    $region56: #{tpu_custom_call.1} parent=1 // pred_region
      %770 = dma.done [#allocation12], 16
    $region57: #{tpu_custom_call.1} parent=1 // pred_fallthru
      _
    // Predicated region
    $region58: #{tpu_custom_call.1} parent=1 // pred_check
      _
    $region59: #{tpu_custom_call.1} parent=1 // pred_check_branch
      %772 = sbr.rel (0) target = $region61
    $region60: #{tpu_custom_call.1} parent=1 // pred_region
      %773 = dma.done [#allocation12], 16
    $region61: #{tpu_custom_call.1} parent=1 // pred_fallthru
      _
    %774 = vsyncpa [#allocation8], 1
    %775 = vsyncpa [#allocation9], 1
    %776 = vsyncpa [#allocation12], 1

</llo_original>
